<compile_context>
chip_gen: v7x
topology: tpu7x:2x2x1
jax: 0.10.0
libtpu: 0.0.40
codegen_flags: <defaults>
</compile_context>

<pallas_src>
import jax
import jax.numpy as jnp
from jax.experimental import pallas as pl
from jax.experimental.pallas import tpu as pltpu


_MAX_BM = 4096  # rows per tile; beyond this there is no measurable pipelining gain
_MIN_BM = 512   # don't shrink tiles below this when splitting for megacore/overlap


def _vmem_capacity_bytes():
    """Physical VMEM per TensorCore (generation aware), with a safe fallback."""
    try:
        return int(pltpu.get_tpu_info().vmem_capacity_bytes)
    except Exception:
        # Conservative fallback (v7x has 64 MiB per TC; v5e/v6e have 128 MiB).
        return 64 * 1024 * 1024


def _pick_tiling(n, c, io_dtype, out_row_bytes):
    """Pick the batch tile size `bm` and the vmem_limit for pallas_call.

    VMEM budget: 2 inputs x 2 pipeline buffers x (bm*c*itemsize)
               + 2 output buffers x (out_row_bytes*bm)
               + ~5 live (bm, c) f32 temporaries from the softmax / KL math,
    kept within ~1/4 of physical VMEM (2x headroom on v7x's 64 MiB).
    """
    cap = _vmem_capacity_bytes()
    budget = cap // 4
    vmem_limit = int(cap // 2)

    in_bytes = jnp.dtype(io_dtype).itemsize
    per_row = c * (4 * in_bytes + 5 * 4) + 2 * out_row_bytes
    # Sublane packing: 8 rows for 32-bit, 16 for bf16.
    mult = max(8, 32 // in_bytes)

    bm = max(mult, (budget // per_row) // mult * mult)
    bm = min(bm, _MAX_BM)

    # Vocab-scale-C guard: even the minimum-sublane tile must fit (double
    # buffered) inside the raised vmem limit — see module TODO for that regime.
    assert mult * per_row <= vmem_limit, (
        f"class axis C={c} too large for single-block-per-row tiling; "
        "needs a class-axis-tiled / online-softmax variant")

    # Prefer >= ~4 grid blocks for large batches (v7x megacore split + DMA /
    # compute overlap on every generation), without dropping below ~512 rows.
    if n > 2 * _MIN_BM:
        quarter = -(-n // 4)                       # ceil(n / 4)
        quarter = -(-quarter // mult) * mult       # round up to sublane multiple
        bm = min(bm, max(_MIN_BM, quarter))
    if bm >= n:
        # Single full-extent block (block_shape == array dims is always legal,
        # even when n is not a sublane multiple).
        bm = n
    return bm, vmem_limit


def _kld_elementwise_kernel(cl_ref, adv_ref, out_ref):
    cl = cl_ref[...].astype(jnp.float32)
    adv = adv_ref[...].astype(jnp.float32)

    cl_shift = cl - jnp.max(cl, axis=-1, keepdims=True)
    adv_shift = adv - jnp.max(adv, axis=-1, keepdims=True)
    cl_exp = jnp.exp(cl_shift)
    cl_sum = jnp.sum(cl_exp, axis=-1, keepdims=True)
    adv_lse = jnp.log(jnp.sum(jnp.exp(adv_shift), axis=-1, keepdims=True))

    # Per-row constants: exact reciprocal / log (one value per row — cheap).
    inv_sum = 1.0 / cl_sum
    row_c = jnp.log(cl_sum) - adv_lse

    # kl = softmax(cl) * (log_softmax(cl) - log_softmax(adv))
    #    = (cl_exp / Z_cl) * ((cl_shift - adv_shift) - (log Z_cl - lse_adv))
    # NOTE: PyTorch's `where(target == 0, 0, ...)` guard is redundant: when
    # exp() underflows to 0 the product is already exactly 0 and every log-term
    # here is finite.
    kl = (cl_exp * inv_sum) * ((cl_shift - adv_shift) - row_c)
    out_ref[...] = kl.astype(out_ref.dtype)


def _kld_rowsum_kernel(cl_ref, adv_ref, out_ref):
    cl = cl_ref[...].astype(jnp.float32)
    adv = adv_ref[...].astype(jnp.float32)

    cl_shift = cl - jnp.max(cl, axis=-1, keepdims=True)
    adv_shift = adv - jnp.max(adv, axis=-1, keepdims=True)
    cl_exp = jnp.exp(cl_shift)
    cl_sum = jnp.sum(cl_exp, axis=-1, keepdims=True)
    adv_lse = jnp.log(jnp.sum(jnp.exp(adv_shift), axis=-1, keepdims=True))

    # sum_j p_j * (logp_j - logq_j)
    #   = (1/Z_cl) * sum_j cl_exp_j * (cl_shift_j - adv_shift_j)
    #     - (log Z_cl - lse_adv)                      [since sum_j p_j == 1]
    # cl_probs is never materialized.
    weighted = jnp.sum(cl_exp * (cl_shift - adv_shift), axis=-1, keepdims=True)
    out_ref[...] = weighted / cl_sum - (jnp.log(cl_sum) - adv_lse)


class KLDLoss:
    """Pallas-TPU implementation of src/attack/trades.py::KLDLoss."""

    def __init__(self, reduction="none"):
        assert reduction in ("none", "mean", "sum-non-batch")
        self.reduction = reduction

    def __call__(self, cl_logits, adv_logits, *, block_rows=None):
        assert cl_logits.shape == adv_logits.shape
        assert cl_logits.ndim == 2, "kernel expects (N, C) logits"
        n, c = cl_logits.shape
        io_dtype = jnp.result_type(cl_logits.dtype, adv_logits.dtype)
        in_bytes = jnp.dtype(io_dtype).itemsize

        if self.reduction == "none":
            out_row_bytes = c * in_bytes
        else:
            out_row_bytes = 4  # one f32 row-sum per row

        bm, vmem_limit = _pick_tiling(n, c, io_dtype, out_row_bytes)
        if block_rows is not None:          # test / tuning override
            bm = min(block_rows, n)

        grid = (pl.cdiv(n, bm),)            # ragged last block, masked by Pallas
        in_specs = [
            pl.BlockSpec((bm, c), lambda i: (i, 0)),
            pl.BlockSpec((bm, c), lambda i: (i, 0)),
        ]
        compiler_params = pltpu.CompilerParams(
            dimension_semantics=("parallel",),   # every block independent (megacore OK)
            vmem_limit_bytes=vmem_limit,
        )
        cost = pl.CostEstimate(
            flops=8 * n * c,
            transcendentals=2 * n * c,
            bytes_accessed=2 * n * c * in_bytes + n * out_row_bytes,
        )

        if self.reduction == "none":
            return pl.pallas_call(
                _kld_elementwise_kernel,
                out_shape=jax.ShapeDtypeStruct((n, c), io_dtype),
                grid=grid,
                in_specs=in_specs,
                out_specs=pl.BlockSpec((bm, c), lambda i: (i, 0)),
                compiler_params=compiler_params,
                cost_estimate=cost,
            )(cl_logits, adv_logits)

        # 'mean' and 'sum-non-batch' share the fully parallel per-row-sum kernel;
        # the remaining reduction over N rows is negligible work finished in
        # plain JAX, keeping the grid parallel across TensorCores.
        row_sums = pl.pallas_call(
            _kld_rowsum_kernel,
            out_shape=jax.ShapeDtypeStruct((n, 1), jnp.float32),
            grid=grid,
            in_specs=in_specs,
            out_specs=pl.BlockSpec((bm, 1), lambda i: (i, 0)),
            compiler_params=compiler_params,
            cost_estimate=cost,
        )(cl_logits, adv_logits)
        row_sums = row_sums[:, 0]

        if self.reduction == "sum-non-batch":
            return row_sums.astype(io_dtype)

        # 'mean': F.kl_div 'mean' divides by the TOTAL number of elements (n*c).
        # (Cast to io_dtype matches PyTorch's output dtype.)
        return (jnp.sum(row_sums) / jnp.float32(n * c)).astype(io_dtype)


if __name__ == "__main__":
    key = jax.random.PRNGKey(0)
    k1, k2 = jax.random.split(key)
    # Small classification-style logits. C=128 keeps the class (lane) axis fully
    # dense; N=10 is not a sublane multiple, and the block_rows=8 runs below
    # exercise the ragged (write-masked) last block that replaced zero padding.
    n, c = 10, 128
    cl_logits = jax.random.normal(k1, (n, c), dtype=jnp.float32)
    adv_logits = cl_logits + 0.1 * jax.random.normal(k2, (n, c), dtype=jnp.float32)

    loss_none = KLDLoss("none")(cl_logits, adv_logits)
    loss_mean = KLDLoss("mean")(cl_logits, adv_logits)
    loss_snb = KLDLoss("sum-non-batch")(cl_logits, adv_logits)
    # Multi-block + ragged-tail path (grid=(2,), last block covers only 2 rows).
    loss_none_rag = KLDLoss("none")(cl_logits, adv_logits, block_rows=8)
    loss_snb_rag = KLDLoss("sum-non-batch")(cl_logits, adv_logits, block_rows=8)
    jax.block_until_ready((loss_none, loss_mean, loss_snb, loss_none_rag, loss_snb_rag))

    # Shape checks.
    assert loss_none.shape == (n, c)
    assert loss_mean.shape == ()
    assert loss_snb.shape == (n,)

    # Pure-JAX reference with PyTorch F.kl_div semantics. Exact (non-approx)
    # reciprocal in the kernel allows tight tolerances now.
    cl_p = jax.nn.softmax(cl_logits, axis=1)
    ref = cl_p * (jax.nn.log_softmax(cl_logits, axis=1)
                  - jax.nn.log_softmax(adv_logits, axis=1))
    assert jnp.allclose(loss_none, ref, rtol=1e-5, atol=1e-6)
    assert jnp.allclose(loss_none_rag, ref, rtol=1e-5, atol=1e-6)
    assert jnp.allclose(loss_mean, ref.mean(), rtol=1e-5, atol=1e-6)
    assert jnp.allclose(loss_snb, ref.sum(axis=1), rtol=1e-5, atol=1e-5)
    assert jnp.allclose(loss_snb_rag, ref.sum(axis=1), rtol=1e-5, atol=1e-5)

    # Cross-reduction consistency.
    assert jnp.allclose(loss_mean, loss_none.mean(), rtol=1e-5, atol=1e-6)
    assert jnp.allclose(loss_snb, loss_none.sum(axis=1), rtol=1e-5, atol=1e-5)

    print("KERNEL_OK")
</pallas_src>

<mosaic_0001>
module attributes {stable_mosaic.version = 11 : i64} {
  func.func @_kld_elementwise_kernel(%arg0: i32, %arg1: memref<10x128xf32, #tpu.memory_space<vmem>>, %arg2: memref<10x128xf32, #tpu.memory_space<vmem>>, %arg3: memref<10x128xf32, #tpu.memory_space<vmem>>) attributes {dimension_semantics = [#tpu.dimension_semantics<parallel>], iteration_bounds = array<i64: 1>, scalar_prefetch = 0 : i64, scratch_operands = 0 : i64, tpu.core_type = #tpu.core_type<tc>, window_params = [{transform_indices = @transform_0, window_bounds = array<i64: 10, 128>}, {transform_indices = @transform_1, window_bounds = array<i64: 10, 128>}, {transform_indices = @transform_2, window_bounds = array<i64: 10, 128>}]} {
    %c0 = arith.constant 0 : index
    %c0_0 = arith.constant 0 : index
    %0 = vector.load %arg1[%c0, %c0_0] : memref<10x128xf32, #tpu.memory_space<vmem>>, vector<10x128xf32>
    %c0_1 = arith.constant 0 : index
    %c0_2 = arith.constant 0 : index
    %1 = vector.load %arg2[%c0_1, %c0_2] : memref<10x128xf32, #tpu.memory_space<vmem>>, vector<10x128xf32>
    %cst = arith.constant dense<0xFF800000> : vector<10xf32>
    %2 = vector.multi_reduction <maximumf>, %0, %cst [1] : vector<10x128xf32> to vector<10xf32>
    %3 = vector.shape_cast %2 : vector<10xf32> to vector<10x1xf32>
    %4 = vector.broadcast %3 : vector<10x1xf32> to vector<10x128xf32>
    %5 = arith.subf %0, %4 : vector<10x128xf32>
    %cst_3 = arith.constant dense<0xFF800000> : vector<10xf32>
    %6 = vector.multi_reduction <maximumf>, %1, %cst_3 [1] : vector<10x128xf32> to vector<10xf32>
    %7 = vector.shape_cast %6 : vector<10xf32> to vector<10x1xf32>
    %8 = vector.broadcast %7 : vector<10x1xf32> to vector<10x128xf32>
    %9 = arith.subf %1, %8 : vector<10x128xf32>
    %10 = math.exp %5 : vector<10x128xf32>
    %cst_4 = arith.constant dense<0.000000e+00> : vector<10xf32>
    %11 = vector.multi_reduction <add>, %10, %cst_4 [1] : vector<10x128xf32> to vector<10xf32>
    %12 = vector.shape_cast %11 : vector<10xf32> to vector<10x1xf32>
    %13 = math.exp %9 : vector<10x128xf32>
    %cst_5 = arith.constant dense<0.000000e+00> : vector<10xf32>
    %14 = vector.multi_reduction <add>, %13, %cst_5 [1] : vector<10x128xf32> to vector<10xf32>
    %15 = vector.shape_cast %14 : vector<10xf32> to vector<10x1xf32>
    %16 = math.log %15 : vector<10x1xf32>
    %cst_6 = arith.constant 1.000000e+00 : f32
    %17 = vector.broadcast %cst_6 : f32 to vector<10x1xf32>
    %18 = arith.divf %17, %12 : vector<10x1xf32>
    %19 = math.log %12 : vector<10x1xf32>
    %20 = arith.subf %19, %16 : vector<10x1xf32>
    %21 = vector.broadcast %18 : vector<10x1xf32> to vector<10x128xf32>
    %22 = arith.mulf %10, %21 : vector<10x128xf32>
    %23 = arith.subf %5, %9 : vector<10x128xf32>
    %24 = vector.broadcast %20 : vector<10x1xf32> to vector<10x128xf32>
    %25 = arith.subf %23, %24 : vector<10x128xf32>
    %26 = arith.mulf %22, %25 : vector<10x128xf32>
    %c0_7 = arith.constant 0 : index
    %c0_8 = arith.constant 0 : index
    %27 = vector.load %arg3[%c0_7, %c0_8] : memref<10x128xf32, #tpu.memory_space<vmem>>, vector<10x128xf32>
    tpu.vector_store %arg3[%c0_7, %c0_8], %26 {strides = array<i32>} : memref<10x128xf32, #tpu.memory_space<vmem>>, vector<10x128xf32>,
    return
  }
  func.func @transform_0(%arg0: i32) -> (i32, i32) {
    %c0_i32 = arith.constant 0 : i32
    %c0_i32_0 = arith.constant 0 : i32
    return %arg0, %c0_i32 : i32, i32
  }
  func.func @transform_1(%arg0: i32) -> (i32, i32) {
    %c0_i32 = arith.constant 0 : i32
    %c0_i32_0 = arith.constant 0 : i32
    return %arg0, %c0_i32 : i32, i32
  }
  func.func @transform_2(%arg0: i32) -> (i32, i32) {
    %c0_i32 = arith.constant 0 : i32
    %c0_i32_0 = arith.constant 0 : i32
    return %arg0, %c0_i32 : i32, i32
  }
}

</mosaic_0001>

<llo_original>
// kernel: tpu_custom_call.1
$region0: #{tpu_custom_call.1}
  #allocation0 [shape = 'u32[]', space=smem, size = 0x4, offset = 0x4, fixed_abs, tag = 'smem constant byte address 0x4 - core index']
  #allocation1 [shape = 'u32[144,128]{1,0:T(1,128)}', space=vmem, size = 0x12000, scoped, tag = 'internal scratch']
  %s0 = inlined_call_operand.hbm [shape: f32[10,128], index: 0, kind: input, shape index: {}]
  %s1 = inlined_call_operand.hbm [shape: f32[10,128], index: 1, kind: input, shape index: {}]
  %s2 = inlined_call_operand.hbm [shape: f32[10,128], index: 2, kind: output, shape index: {}]
  %s3 = sld [smem:[#allocation0]]
  $region26: #{tpu_custom_call.1} parent=0
    _
  %s5 = ssub.s32 1, %s3
  %s6 = scalar_select 0, %s5, %s3
  $region1: #{tpu_custom_call.1} parent=0
    #allocation2 [shape = 'u8[8192]{0}', space=vmem, size = 0x2000, scoped, tag = 'input window, operand 0, single buffered']
    #allocation3 [shape = 's32[1]{0}', space=sflag, size = 0x4, scoped, tag = 'scoped memory for tpu_custom_call.1']
    #allocation4 [shape = 's32[1]{0}', space=sflag, size = 0x4, scoped, tag = 'scoped memory for tpu_custom_call.1']
    #allocation5 [shape = 'u8[8192]{0}', space=vmem, size = 0x2000, scoped, tag = 'input window, operand 1, single buffered']
    #allocation6 [shape = 's32[1]{0}', space=sflag, size = 0x4, scoped, tag = 'scoped memory for tpu_custom_call.1']
    #allocation7 [shape = 'u8[8192]{0}', space=vmem, size = 0x2000, scoped, tag = 'output window, operand 0, single buffered']
    %7 = vsyncpa [#allocation3], 0
    %8 = vsyncpa [#allocation6], 0
    %9 = vsyncpa [#allocation4], 0
    // Predicated region
    $region2: #{tpu_custom_call.1} parent=1 // pred_check
      _
    $region3: #{tpu_custom_call.1} parent=1 // pred_check_branch
      %11 = sbr.rel (0) target = $region5
    $region4: #{tpu_custom_call.1} parent=1 // pred_region
      %s13 = ssub.s32 256, 256
      %14 = vsyncadd [#allocation3], %s13
      %s15 = sshll.u32 [#allocation2], 4
      %s16 = int_to_ptr.vmem [resolvable:$true] %s15
      %21 = dma.hbm_to_vmem [thread:$0]  %s0, 256, %s16, [#allocation3], 128, 128, 8
    $region5: #{tpu_custom_call.1} parent=1 // pred_fallthru
      _
    // Predicated region
    $region6: #{tpu_custom_call.1} parent=1 // pred_check
      _
    $region7: #{tpu_custom_call.1} parent=1 // pred_check_branch
      %23 = sbr.rel (0) target = $region9
    $region8: #{tpu_custom_call.1} parent=1 // pred_region
      %s25 = ssub.s32 256, 256
      %26 = vsyncadd [#allocation6], %s25
      %s27 = sshll.u32 [#allocation5], 4
      %s28 = int_to_ptr.vmem [resolvable:$true] %s27
      %33 = dma.hbm_to_vmem [thread:$0]  %s1, 256, %s28, [#allocation6], 128, 128, 8
    $region9: #{tpu_custom_call.1} parent=1 // pred_fallthru
      _
    // Predicated region
    $region10: #{tpu_custom_call.1} parent=1 // pred_check
      _
    $region11: #{tpu_custom_call.1} parent=1 // pred_check_branch
      %35 = sbr.rel (0) target = $region13
    $region12: #{tpu_custom_call.1} parent=1 // pred_region
      %36 = dma.done [#allocation3], 256
    $region13: #{tpu_custom_call.1} parent=1 // pred_fallthru
      _
    // Predicated region
    $region14: #{tpu_custom_call.1} parent=1 // pred_check
      _
    $region15: #{tpu_custom_call.1} parent=1 // pred_check_branch
      %38 = sbr.rel (0) target = $region17
    $region16: #{tpu_custom_call.1} parent=1 // pred_region
      %39 = dma.done [#allocation6], 256
    $region17: #{tpu_custom_call.1} parent=1 // pred_fallthru
      _
    %v40 = vld [vmem:[#allocation2] sm:$0xff]
    %v41 = vld [vmem:[#allocation2 + $0x8] sm:$0x3]
    %v42 = vld [vmem:[#allocation5] sm:$0xff]
    %v43 = vld [vmem:[#allocation5 + $0x8] sm:$0x3]
    %44 = vmax.xlane.f32.xlu0 %v40
    %v45 = vpop.xlane.xlu0 %44
    %vm46 = vcmask 1041408
    %v47 = vsel %vm46, %v41, -inf
    %48 = vmax.xlane.f32.xlu0 %v47
    %v49 = vpop.xlane.xlu0 %48
    %v50 = vsub.f32 %v40, %v45
    %v51 = vsub.f32 %v41, %v49
    %52 = vmax.xlane.f32.xlu0 %v42
    %v53 = vpop.xlane.xlu0 %52
    %v54 = vsel %vm46, %v43, -inf
    %55 = vmax.xlane.f32.xlu0 %v54
    %v56 = vpop.xlane.xlu0 %55
    %v57 = vsub.f32 %v42, %v53
    %v58 = vsub.f32 %v43, %v56
    %v59 = vmul.f32 %v50, 1.442695
    %v60 = vpow.pop %v59
    %v61 = vmul.f32 %v51, 1.442695
    %v62 = vpow.pop %v61
    %63 = vadd.xlane.f32.xlu0 %v60
    %v64 = vpop.xlane.xlu0 %63
    %v65 = vsel %vm46, %v62, 0.0
    %66 = vadd.xlane.f32.xlu0 %v65
    %v67 = vpop.xlane.xlu0 %66
    %v68 = vmul.f32 %v57, 1.442695
    %v69 = vpow.pop %v68
    %v70 = vmul.f32 %v58, 1.442695
    %v71 = vpow.pop %v70
    %72 = vadd.xlane.f32.xlu0 %v69
    %v73 = vpop.xlane.xlu0 %72
    %v74 = vsel %vm46, %v71, 0.0
    %75 = vadd.xlane.f32.xlu0 %v74
    %v76 = vpop.xlane.xlu0 %75
    %v77 = vlog2.pop %v73
    %v78 = vmul.f32 %v77, 0.6931472
    %v79 = vlog2.pop %v76
    %v80 = vmul.f32 %v79, 0.6931472
    %v81 = vrcp.pop %v64
    %v82 = vmul.f32 1.0, %v81
    %v83 = vrcp.pop %v67
    %v84 = vmul.f32 1.0, %v83
    %v85 = vlog2.pop %v64
    %v86 = vmul.f32 %v85, 0.6931472
    %v87 = vlog2.pop %v67
    %v88 = vmul.f32 %v87, 0.6931472
    %v89 = vsub.f32 %v86, %v78
    %v90 = vsub.f32 %v88, %v80
    %v91 = vmul.f32 %v60, %v82
    %v92 = vmul.f32 %v62, %v84
    %v93 = vsub.f32 %v50, %v57
    %v94 = vsub.f32 %v51, %v58
    %v95 = vsub.f32 %v93, %v89
    %v96 = vsub.f32 %v94, %v90
    %v97 = vmul.f32 %v91, %v95
    %v98 = vmul.f32 %v92, %v96
    %99 = vst [vmem:[#allocation7] sm:$0xff] %v97
    %100 = vst [vmem:[#allocation7 + $0x8] sm:$0x3] %v98
    // Predicated region
    $region18: #{tpu_custom_call.1} parent=1 // pred_check
      _
    $region19: #{tpu_custom_call.1} parent=1 // pred_check_branch
      %102 = sbr.rel (0) target = $region21
    $region20: #{tpu_custom_call.1} parent=1 // pred_region
      %s104 = ssub.s32 256, 256
      %105 = vsyncadd [#allocation4], %s104
      %s106 = sshll.u32 [#allocation7], 4
      %s107 = int_to_ptr.vmem [resolvable:$true] %s106
      %112 = dma.vmem_to_hbm [thread:$0]  %s107, 256, %s2, [#allocation4], 128, 128, 8
    $region21: #{tpu_custom_call.1} parent=1 // pred_fallthru
      _
    // Predicated region
    $region22: #{tpu_custom_call.1} parent=1 // pred_check
      _
    $region23: #{tpu_custom_call.1} parent=1 // pred_check_branch
      %114 = sbr.rel (0) target = $region25
    $region24: #{tpu_custom_call.1} parent=1 // pred_region
      %115 = dma.done [#allocation4], 256
    $region25: #{tpu_custom_call.1} parent=1 // pred_fallthru
      _
    %116 = vsyncpa [#allocation3], 1
    %117 = vsyncpa [#allocation6], 1
    %118 = vsyncpa [#allocation4], 1

</llo_original>
